<compile_context>
chip_gen: v5e
topology: v5e:2x2
jax: 0.10.0
libtpu: 0.0.40
codegen_flags: <defaults>
</compile_context>

<pallas_src>
import math
import functools

import jax
import jax.numpy as jnp
from jax import lax
from jax.experimental import pallas as pl
from jax.experimental.pallas import tpu as pltpu

LANES = 128
MAX_TILE_ROWS = 1024   # (1024,128) f32 block = 512 KiB; 4 arrays x 2 buffers = 4 MiB VMEM


def _hash_u32(x):
    # lowbias32 (Chris Wellons) integer avalanche hash — pure xor/shift/mul ops.
    x = x ^ (x >> jnp.uint32(16))
    x = x * jnp.uint32(0x7FEB352D)
    x = x ^ (x >> jnp.uint32(15))
    x = x * jnp.uint32(0x846CA68B)
    x = x ^ (x >> jnp.uint32(16))
    return x


def _uniform01(bits_u32):
    # top 24 bits -> uniform in [0, 1).  Route through int32 so only the
    # well-supported s32->f32 convert is required.
    b = (bits_u32 >> jnp.uint32(8)).astype(jnp.int32)
    return b.astype(jnp.float32) * jnp.float32(1.0 / (1 << 24))


def _erf(x):
    # Abramowitz & Stegun 7.1.26 rational approximation (|err| < 1.5e-7 with exact
    # division; ~1e-4 with approx reciprocal — fine for a Bernoulli probability).
    a1, a2, a3, a4, a5 = (0.254829592, -0.284496736, 1.421413741,
                          -1.453152027, 1.061405429)
    p = 0.3275911
    ax = jnp.abs(x)
    t = pl.reciprocal(1.0 + p * ax, approx=True)
    poly = ((((a5 * t + a4) * t + a3) * t + a2) * t + a1) * t
    y = 1.0 - poly * jnp.exp(-ax * ax)
    return jnp.where(x >= 0, y, -y)


def _spike_prob(mem_shift, inv_sigma_sqrt2):
    # P(spike) = Phi(mem_shift / (sigma*sqrt(2)))
    return 0.5 * (1.0 + _erf(mem_shift * jnp.float32(inv_sigma_sqrt2)))


def _noisy_lif_kernel(seed_ref, x_ref, mem_ref, spk_ref, mem_out_ref, *,
                      beta, threshold, graded, inv_sigma_sqrt2):
    shape = x_ref.shape
    tile_elems = shape[0] * shape[1]

    # ---- counter-based per-element uniforms (independent streams: reset, fire)
    row = lax.broadcasted_iota(jnp.int32, shape, 0)
    col = lax.broadcasted_iota(jnp.int32, shape, 1)
    gidx = (pl.program_id(0) * tile_elems + row * shape[1] + col).astype(jnp.uint32)
    seed_u = seed_ref[0].astype(jnp.uint32)
    k_reset = _hash_u32(seed_u ^ jnp.uint32(0x243F6A88))
    k_fire = _hash_u32(seed_u ^ jnp.uint32(0x85A308D3))
    u_reset = _uniform01(_hash_u32(gidx ^ k_reset))
    u_fire = _uniform01(_hash_u32(gidx ^ k_fire))

    # ---- LIF compute (f32 internally, native dtype at the HBM boundary)
    x = x_ref[...].astype(jnp.float32)
    mem = mem_ref[...].astype(jnp.float32)

    # reset = mem_reset(mem_prev)  (detached in torch; forward-only here)
    reset = (u_reset < _spike_prob(mem - threshold, inv_sigma_sqrt2)).astype(jnp.float32)

    # leaky integration, 'subtract' reset mechanism
    mem_new = jnp.float32(beta) * mem + x - reset * jnp.float32(threshold)

    # spk = fire(mem_new) * graded_spikes_factor
    spk = (u_fire < _spike_prob(mem_new - threshold, inv_sigma_sqrt2)).astype(jnp.float32)
    spk = spk * jnp.float32(graded)

    spk_ref[...] = spk.astype(spk_ref.dtype)
    mem_out_ref[...] = mem_new.astype(mem_out_ref.dtype)


def noisy_lif_step(x, mem, seed, *, beta=0.9, threshold=1.0,
                   graded_spikes_factor=1.0, noise_scale=0.3):
    """x, mem: float arrays (e.g. NCHW) of identical shape.  Returns (spk, mem_new)."""
    orig_shape = x.shape
    out_dtype = x.dtype
    n = int(x.size)

    # Flatten to a lane-dense (rows, 128) slab; pad the tail instead of falling back
    # to a single giant block, so the pipeline always double-buffers.
    rows = -(-n // LANES)
    tile_rows = min(MAX_TILE_ROWS, ((rows + 7) // 8) * 8)
    padded_rows = ((rows + tile_rows - 1) // tile_rows) * tile_rows
    n_pad = padded_rows * LANES

    x_flat = x.reshape(-1)
    m_flat = mem.reshape(-1)
    if n_pad != n:
        x_flat = jnp.pad(x_flat, (0, n_pad - n))
        m_flat = jnp.pad(m_flat, (0, n_pad - n))
    x2 = x_flat.reshape(padded_rows, LANES)
    m2 = m_flat.reshape(padded_rows, LANES)
    seed_arr = jnp.asarray(seed, dtype=jnp.int32).reshape((1,))

    kernel = functools.partial(
        _noisy_lif_kernel,
        beta=float(beta), threshold=float(threshold),
        graded=float(graded_spikes_factor),
        inv_sigma_sqrt2=1.0 / (float(noise_scale) * math.sqrt(2.0)))

    block = pl.BlockSpec((tile_rows, LANES), lambda i, seed_ref: (i, 0))
    spk2, mem2 = pl.pallas_call(
        kernel,
        out_shape=(jax.ShapeDtypeStruct((padded_rows, LANES), out_dtype),
                   jax.ShapeDtypeStruct((padded_rows, LANES), out_dtype)),
        grid_spec=pltpu.PrefetchScalarGridSpec(
            num_scalar_prefetch=1,                 # seed lands in SMEM
            grid=(padded_rows // tile_rows,),
            in_specs=[block, block],
            out_specs=[block, block],
        ),
        compiler_params=pltpu.CompilerParams(
            dimension_semantics=("parallel",)),    # elementwise: shard across TCs on v7x
    )(seed_arr, x2, m2)

    spk = spk2.reshape(-1)[:n].reshape(orig_shape)
    mem_new = mem2.reshape(-1)[:n].reshape(orig_shape)
    return spk, mem_new


if __name__ == "__main__":
    key = jax.random.PRNGKey(0)
    kx, km = jax.random.split(key)

    B, C, H, W = 2, 4, 16, 16                      # NCHW, like a conv feature map
    x = jax.random.normal(kx, (B, C, H, W), dtype=jnp.float32) * 0.5
    mem = jax.random.normal(km, (B, C, H, W), dtype=jnp.float32) * 0.5 + 0.5

    beta = 0.9
    threshold = 1.0
    graded = 1.0
    noise_scale = 0.3                              # Gaussian noise_type default

    spk, mem_new = noisy_lif_step(
        x, mem, 0,
        beta=beta, threshold=threshold,
        graded_spikes_factor=graded, noise_scale=noise_scale)

    spk = jax.block_until_ready(spk)
    mem_new = jax.block_until_ready(mem_new)

    # sanity: shapes preserved, finite, spikes in {0, graded}
    assert spk.shape == x.shape and mem_new.shape == x.shape
    assert bool(jnp.all(jnp.isfinite(spk))) and bool(jnp.all(jnp.isfinite(mem_new)))
    assert bool(jnp.all((spk == 0.0) | (spk == graded)))

    # deterministic check: mem_new must equal beta*mem + x - r*threshold for r in {0,1}
    mem0 = beta * mem + x
    mem1 = mem0 - threshold
    d = jnp.minimum(jnp.abs(mem_new - mem0), jnp.abs(mem_new - mem1))
    assert bool(jnp.all(d < 1e-5))

    # statistical check: observed mean spike rate vs exact marginal probability
    inv = 1.0 / (noise_scale * math.sqrt(2.0))
    phi = lambda z: 0.5 * (1.0 + jax.scipy.special.erf(z * inv))
    p_reset = phi(mem - threshold)
    p_spk = p_reset * phi(mem1 - threshold) + (1.0 - p_reset) * phi(mem0 - threshold)
    assert abs(float(jnp.mean(spk / graded)) - float(jnp.mean(p_spk))) < 0.1

    print("KERNEL_OK")
</pallas_src>

<mosaic_0001>
module attributes {stable_mosaic.version = 11 : i64} {
  func.func @_noisy_lif_kernel(%arg0: i32, %arg1: memref<1xi32, #tpu.memory_space<smem>>, %arg2: memref<16x128xf32, #tpu.memory_space<vmem>>, %arg3: memref<16x128xf32, #tpu.memory_space<vmem>>, %arg4: memref<16x128xf32, #tpu.memory_space<vmem>>, %arg5: memref<16x128xf32, #tpu.memory_space<vmem>>) attributes {dimension_semantics = [#tpu.dimension_semantics<parallel>], iteration_bounds = array<i64: 1>, scalar_prefetch = 1 : i64, scratch_operands = 0 : i64, tpu.core_type = #tpu.core_type<tc>, window_params = [{transform_indices = @transform_0, window_bounds = array<i64: 16, 128>}, {transform_indices = @transform_1, window_bounds = array<i64: 16, 128>}, {transform_indices = @transform_2, window_bounds = array<i64: 16, 128>}, {transform_indices = @transform_3, window_bounds = array<i64: 16, 128>}]} {
    %0 = tpu.iota {dimensions = array<i32: 0>} : vector<16x128xi32>
    %1 = tpu.iota {dimensions = array<i32: 1>} : vector<16x128xi32>
    %c2048_i32 = arith.constant 2048 : i32
    %2 = arith.muli %arg0, %c2048_i32 : i32
    %c128_i32 = arith.constant 128 : i32
    %3 = vector.broadcast %c128_i32 : i32 to vector<16x128xi32>
    %4 = arith.muli %0, %3 : vector<16x128xi32>
    %5 = vector.broadcast %2 : i32 to vector<16x128xi32>
    %6 = arith.addi %5, %4 : vector<16x128xi32>
    %7 = arith.addi %6, %1 : vector<16x128xi32>
    %c0 = arith.constant 0 : index
    %8 = memref.load %arg1[%c0] : memref<1xi32, #tpu.memory_space<smem>>
    %c608135816_i32 = arith.constant 608135816 : i32
    %9 = arith.xori %8, %c608135816_i32 : i32
    %c16_i32 = arith.constant 16 : i32
    %10 = arith.shrui %9, %c16_i32 : i32
    %11 = arith.xori %9, %10 : i32
    %c2146121005_i32 = arith.constant 2146121005 : i32
    %12 = arith.muli %11, %c2146121005_i32 : i32
    %c15_i32 = arith.constant 15 : i32
    %13 = arith.shrui %12, %c15_i32 : i32
    %14 = arith.xori %12, %13 : i32
    %c-2073254261_i32 = arith.constant -2073254261 : i32
    %15 = arith.muli %14, %c-2073254261_i32 : i32
    %c16_i32_0 = arith.constant 16 : i32
    %16 = arith.shrui %15, %c16_i32_0 : i32
    %17 = arith.xori %15, %16 : i32
    %c-2052912941_i32 = arith.constant -2052912941 : i32
    %18 = arith.xori %8, %c-2052912941_i32 : i32
    %c16_i32_1 = arith.constant 16 : i32
    %19 = arith.shrui %18, %c16_i32_1 : i32
    %20 = arith.xori %18, %19 : i32
    %c2146121005_i32_2 = arith.constant 2146121005 : i32
    %21 = arith.muli %20, %c2146121005_i32_2 : i32
    %c15_i32_3 = arith.constant 15 : i32
    %22 = arith.shrui %21, %c15_i32_3 : i32
    %23 = arith.xori %21, %22 : i32
    %c-2073254261_i32_4 = arith.constant -2073254261 : i32
    %24 = arith.muli %23, %c-2073254261_i32_4 : i32
    %c16_i32_5 = arith.constant 16 : i32
    %25 = arith.shrui %24, %c16_i32_5 : i32
    %26 = arith.xori %24, %25 : i32
    %27 = vector.broadcast %17 : i32 to vector<16x128xi32>
    %28 = arith.xori %7, %27 : vector<16x128xi32>
    %c16_i32_6 = arith.constant 16 : i32
    %29 = vector.broadcast %c16_i32_6 : i32 to vector<16x128xi32>
    %30 = arith.shrui %28, %29 : vector<16x128xi32>
    %31 = arith.xori %28, %30 : vector<16x128xi32>
    %c2146121005_i32_7 = arith.constant 2146121005 : i32
    %32 = vector.broadcast %c2146121005_i32_7 : i32 to vector<16x128xi32>
    %33 = arith.muli %31, %32 : vector<16x128xi32>
    %c15_i32_8 = arith.constant 15 : i32
    %34 = vector.broadcast %c15_i32_8 : i32 to vector<16x128xi32>
    %35 = arith.shrui %33, %34 : vector<16x128xi32>
    %36 = arith.xori %33, %35 : vector<16x128xi32>
    %c-2073254261_i32_9 = arith.constant -2073254261 : i32
    %37 = vector.broadcast %c-2073254261_i32_9 : i32 to vector<16x128xi32>
    %38 = arith.muli %36, %37 : vector<16x128xi32>
    %c16_i32_10 = arith.constant 16 : i32
    %39 = vector.broadcast %c16_i32_10 : i32 to vector<16x128xi32>
    %40 = arith.shrui %38, %39 : vector<16x128xi32>
    %41 = arith.xori %38, %40 : vector<16x128xi32>
    %c8_i32 = arith.constant 8 : i32
    %42 = vector.broadcast %c8_i32 : i32 to vector<16x128xi32>
    %43 = arith.shrui %41, %42 : vector<16x128xi32>
    %44 = arith.sitofp %43 : vector<16x128xi32> to vector<16x128xf32>
    %cst = arith.constant 5.96046448E-8 : f32
    %45 = vector.broadcast %cst : f32 to vector<16x128xf32>
    %46 = arith.mulf %44, %45 : vector<16x128xf32>
    %47 = vector.broadcast %26 : i32 to vector<16x128xi32>
    %48 = arith.xori %7, %47 : vector<16x128xi32>
    %c16_i32_11 = arith.constant 16 : i32
    %49 = vector.broadcast %c16_i32_11 : i32 to vector<16x128xi32>
    %50 = arith.shrui %48, %49 : vector<16x128xi32>
    %51 = arith.xori %48, %50 : vector<16x128xi32>
    %c2146121005_i32_12 = arith.constant 2146121005 : i32
    %52 = vector.broadcast %c2146121005_i32_12 : i32 to vector<16x128xi32>
    %53 = arith.muli %51, %52 : vector<16x128xi32>
    %c15_i32_13 = arith.constant 15 : i32
    %54 = vector.broadcast %c15_i32_13 : i32 to vector<16x128xi32>
    %55 = arith.shrui %53, %54 : vector<16x128xi32>
    %56 = arith.xori %53, %55 : vector<16x128xi32>
    %c-2073254261_i32_14 = arith.constant -2073254261 : i32
    %57 = vector.broadcast %c-2073254261_i32_14 : i32 to vector<16x128xi32>
    %58 = arith.muli %56, %57 : vector<16x128xi32>
    %c16_i32_15 = arith.constant 16 : i32
    %59 = vector.broadcast %c16_i32_15 : i32 to vector<16x128xi32>
    %60 = arith.shrui %58, %59 : vector<16x128xi32>
    %61 = arith.xori %58, %60 : vector<16x128xi32>
    %c8_i32_16 = arith.constant 8 : i32
    %62 = vector.broadcast %c8_i32_16 : i32 to vector<16x128xi32>
    %63 = arith.shrui %61, %62 : vector<16x128xi32>
    %64 = arith.sitofp %63 : vector<16x128xi32> to vector<16x128xf32>
    %cst_17 = arith.constant 5.96046448E-8 : f32
    %65 = vector.broadcast %cst_17 : f32 to vector<16x128xf32>
    %66 = arith.mulf %64, %65 : vector<16x128xf32>
    %c0_18 = arith.constant 0 : index
    %c0_19 = arith.constant 0 : index
    %67 = vector.load %arg2[%c0_18, %c0_19] : memref<16x128xf32, #tpu.memory_space<vmem>>, vector<16x128xf32>
    %c0_20 = arith.constant 0 : index
    %c0_21 = arith.constant 0 : index
    %68 = vector.load %arg3[%c0_20, %c0_21] : memref<16x128xf32, #tpu.memory_space<vmem>>, vector<16x128xf32>
    %cst_22 = arith.constant 1.000000e+00 : f32
    %69 = vector.broadcast %cst_22 : f32 to vector<16x128xf32>
    %70 = arith.subf %68, %69 : vector<16x128xf32>
    %cst_23 = arith.constant 2.35702252 : f32
    %71 = vector.broadcast %cst_23 : f32 to vector<16x128xf32>
    %72 = arith.mulf %70, %71 : vector<16x128xf32>
    %73 = math.absf %72 : vector<16x128xf32>
    %cst_24 = arith.constant 0.327591091 : f32
    %74 = vector.broadcast %cst_24 : f32 to vector<16x128xf32>
    %75 = arith.mulf %74, %73 : vector<16x128xf32>
    %cst_25 = arith.constant 1.000000e+00 : f32
    %76 = vector.broadcast %cst_25 : f32 to vector<16x128xf32>
    %77 = arith.addf %76, %75 : vector<16x128xf32>
    %78 = tpu.reciprocal %77 {approx = true} : vector<16x128xf32> -> vector<16x128xf32>
    %cst_26 = arith.constant 1.06140542 : f32
    %79 = vector.broadcast %cst_26 : f32 to vector<16x128xf32>
    %80 = arith.mulf %79, %78 : vector<16x128xf32>
    %cst_27 = arith.constant -1.45315206 : f32
    %81 = vector.broadcast %cst_27 : f32 to vector<16x128xf32>
    %82 = arith.addf %80, %81 : vector<16x128xf32>
    %83 = arith.mulf %82, %78 : vector<16x128xf32>
    %cst_28 = arith.constant 1.42141378 : f32
    %84 = vector.broadcast %cst_28 : f32 to vector<16x128xf32>
    %85 = arith.addf %83, %84 : vector<16x128xf32>
    %86 = arith.mulf %85, %78 : vector<16x128xf32>
    %cst_29 = arith.constant -0.284496725 : f32
    %87 = vector.broadcast %cst_29 : f32 to vector<16x128xf32>
    %88 = arith.addf %86, %87 : vector<16x128xf32>
    %89 = arith.mulf %88, %78 : vector<16x128xf32>
    %cst_30 = arith.constant 0.254829586 : f32
    %90 = vector.broadcast %cst_30 : f32 to vector<16x128xf32>
    %91 = arith.addf %89, %90 : vector<16x128xf32>
    %92 = arith.mulf %91, %78 : vector<16x128xf32>
    %cst_31 = arith.constant 0.000000e+00 : f32
    %93 = vector.broadcast %cst_31 : f32 to vector<16x128xf32>
    %94 = arith.subf %93, %73 : vector<16x128xf32>
    %95 = arith.mulf %94, %73 : vector<16x128xf32>
    %96 = math.exp %95 : vector<16x128xf32>
    %97 = arith.mulf %92, %96 : vector<16x128xf32>
    %cst_32 = arith.constant 1.000000e+00 : f32
    %98 = vector.broadcast %cst_32 : f32 to vector<16x128xf32>
    %99 = arith.subf %98, %97 : vector<16x128xf32>
    %cst_33 = arith.constant 0.000000e+00 : f32
    %100 = vector.broadcast %cst_33 : f32 to vector<16x128xf32>
    %101 = arith.cmpf oge, %72, %100 : vector<16x128xf32>
    %cst_34 = arith.constant 0.000000e+00 : f32
    %102 = vector.broadcast %cst_34 : f32 to vector<16x128xf32>
    %103 = arith.subf %102, %99 : vector<16x128xf32>
    %104 = arith.select %101, %99, %103 : vector<16x128xi1>, vector<16x128xf32>
    %cst_35 = arith.constant 1.000000e+00 : f32
    %105 = vector.broadcast %cst_35 : f32 to vector<16x128xf32>
    %106 = arith.addf %105, %104 : vector<16x128xf32>
    %cst_36 = arith.constant 5.000000e-01 : f32
    %107 = vector.broadcast %cst_36 : f32 to vector<16x128xf32>
    %108 = arith.mulf %107, %106 : vector<16x128xf32>
    %109 = arith.cmpf olt, %46, %108 : vector<16x128xf32>
    %110 = arith.extui %109 : vector<16x128xi1> to vector<16x128xi32>
    %111 = arith.sitofp %110 : vector<16x128xi32> to vector<16x128xf32>
    %cst_37 = arith.constant 0.899999976 : f32
    %112 = vector.broadcast %cst_37 : f32 to vector<16x128xf32>
    %113 = arith.mulf %112, %68 : vector<16x128xf32>
    %114 = arith.addf %113, %67 : vector<16x128xf32>
    %cst_38 = arith.constant 1.000000e+00 : f32
    %115 = vector.broadcast %cst_38 : f32 to vector<16x128xf32>
    %116 = arith.mulf %111, %115 : vector<16x128xf32>
    %117 = arith.subf %114, %116 : vector<16x128xf32>
    %cst_39 = arith.constant 1.000000e+00 : f32
    %118 = vector.broadcast %cst_39 : f32 to vector<16x128xf32>
    %119 = arith.subf %117, %118 : vector<16x128xf32>
    %cst_40 = arith.constant 2.35702252 : f32
    %120 = vector.broadcast %cst_40 : f32 to vector<16x128xf32>
    %121 = arith.mulf %119, %120 : vector<16x128xf32>
    %122 = math.absf %121 : vector<16x128xf32>
    %cst_41 = arith.constant 0.327591091 : f32
    %123 = vector.broadcast %cst_41 : f32 to vector<16x128xf32>
    %124 = arith.mulf %123, %122 : vector<16x128xf32>
    %cst_42 = arith.constant 1.000000e+00 : f32
    %125 = vector.broadcast %cst_42 : f32 to vector<16x128xf32>
    %126 = arith.addf %125, %124 : vector<16x128xf32>
    %127 = tpu.reciprocal %126 {approx = true} : vector<16x128xf32> -> vector<16x128xf32>
    %cst_43 = arith.constant 1.06140542 : f32
    %128 = vector.broadcast %cst_43 : f32 to vector<16x128xf32>
    %129 = arith.mulf %128, %127 : vector<16x128xf32>
    %cst_44 = arith.constant -1.45315206 : f32
    %130 = vector.broadcast %cst_44 : f32 to vector<16x128xf32>
    %131 = arith.addf %129, %130 : vector<16x128xf32>
    %132 = arith.mulf %131, %127 : vector<16x128xf32>
    %cst_45 = arith.constant 1.42141378 : f32
    %133 = vector.broadcast %cst_45 : f32 to vector<16x128xf32>
    %134 = arith.addf %132, %133 : vector<16x128xf32>
    %135 = arith.mulf %134, %127 : vector<16x128xf32>
    %cst_46 = arith.constant -0.284496725 : f32
    %136 = vector.broadcast %cst_46 : f32 to vector<16x128xf32>
    %137 = arith.addf %135, %136 : vector<16x128xf32>
    %138 = arith.mulf %137, %127 : vector<16x128xf32>
    %cst_47 = arith.constant 0.254829586 : f32
    %139 = vector.broadcast %cst_47 : f32 to vector<16x128xf32>
    %140 = arith.addf %138, %139 : vector<16x128xf32>
    %141 = arith.mulf %140, %127 : vector<16x128xf32>
    %cst_48 = arith.constant 0.000000e+00 : f32
    %142 = vector.broadcast %cst_48 : f32 to vector<16x128xf32>
    %143 = arith.subf %142, %122 : vector<16x128xf32>
    %144 = arith.mulf %143, %122 : vector<16x128xf32>
    %145 = math.exp %144 : vector<16x128xf32>
    %146 = arith.mulf %141, %145 : vector<16x128xf32>
    %cst_49 = arith.constant 1.000000e+00 : f32
    %147 = vector.broadcast %cst_49 : f32 to vector<16x128xf32>
    %148 = arith.subf %147, %146 : vector<16x128xf32>
    %cst_50 = arith.constant 0.000000e+00 : f32
    %149 = vector.broadcast %cst_50 : f32 to vector<16x128xf32>
    %150 = arith.cmpf oge, %121, %149 : vector<16x128xf32>
    %cst_51 = arith.constant 0.000000e+00 : f32
    %151 = vector.broadcast %cst_51 : f32 to vector<16x128xf32>
    %152 = arith.subf %151, %148 : vector<16x128xf32>
    %153 = arith.select %150, %148, %152 : vector<16x128xi1>, vector<16x128xf32>
    %cst_52 = arith.constant 1.000000e+00 : f32
    %154 = vector.broadcast %cst_52 : f32 to vector<16x128xf32>
    %155 = arith.addf %154, %153 : vector<16x128xf32>
    %cst_53 = arith.constant 5.000000e-01 : f32
    %156 = vector.broadcast %cst_53 : f32 to vector<16x128xf32>
    %157 = arith.mulf %156, %155 : vector<16x128xf32>
    %158 = arith.cmpf olt, %66, %157 : vector<16x128xf32>
    %159 = arith.extui %158 : vector<16x128xi1> to vector<16x128xi32>
    %160 = arith.sitofp %159 : vector<16x128xi32> to vector<16x128xf32>
    %cst_54 = arith.constant 1.000000e+00 : f32
    %161 = vector.broadcast %cst_54 : f32 to vector<16x128xf32>
    %162 = arith.mulf %160, %161 : vector<16x128xf32>
    %c0_55 = arith.constant 0 : index
    %c0_56 = arith.constant 0 : index
    %163 = vector.load %arg4[%c0_55, %c0_56] : memref<16x128xf32, #tpu.memory_space<vmem>>, vector<16x128xf32>
    tpu.vector_store %arg4[%c0_55, %c0_56], %162 {strides = array<i32>} : memref<16x128xf32, #tpu.memory_space<vmem>>, vector<16x128xf32>,
    %c0_57 = arith.constant 0 : index
    %c0_58 = arith.constant 0 : index
    %164 = vector.load %arg5[%c0_57, %c0_58] : memref<16x128xf32, #tpu.memory_space<vmem>>, vector<16x128xf32>
    tpu.vector_store %arg5[%c0_57, %c0_58], %117 {strides = array<i32>} : memref<16x128xf32, #tpu.memory_space<vmem>>, vector<16x128xf32>,
    return
  }
  func.func @transform_0(%arg0: i32, %arg1: memref<1xi32, #tpu.memory_space<smem>>) -> (i32, i32) {
    %c0_i32 = arith.constant 0 : i32
    %c0_i32_0 = arith.constant 0 : i32
    return %arg0, %c0_i32 : i32, i32
  }
  func.func @transform_1(%arg0: i32, %arg1: memref<1xi32, #tpu.memory_space<smem>>) -> (i32, i32) {
    %c0_i32 = arith.constant 0 : i32
    %c0_i32_0 = arith.constant 0 : i32
    return %arg0, %c0_i32 : i32, i32
  }
  func.func @transform_2(%arg0: i32, %arg1: memref<1xi32, #tpu.memory_space<smem>>) -> (i32, i32) {
    %c0_i32 = arith.constant 0 : i32
    %c0_i32_0 = arith.constant 0 : i32
    return %arg0, %c0_i32 : i32, i32
  }
  func.func @transform_3(%arg0: i32, %arg1: memref<1xi32, #tpu.memory_space<smem>>) -> (i32, i32) {
    %c0_i32 = arith.constant 0 : i32
    %c0_i32_0 = arith.constant 0 : i32
    return %arg0, %c0_i32 : i32, i32
  }
}

</mosaic_0001>

<llo_original>
// kernel: tpu_custom_call.1
$region0: #{tpu_custom_call.1}
  #allocation0 [shape = 'u32[]', space=smem, size = 0x4, offset = 0x4, fixed_abs, tag = 'smem constant byte address 0x4 - core index']
  #allocation1 [shape = 'u32[72,128]{1,0:T(1,128)}', space=vmem, size = 0x9000, scoped, tag = 'internal scratch']
  #allocation2 [shape = 's32[1]{0}', space=sflag, size = 0x4, scoped, tag = 'scoped memory for tpu_custom_call.1']
  #allocation3 [shape = 's32[1]{0:T(128)S(6)}', space=smem, size = 0x200, scoped, tag = 'prefetched SMEM operand 0']
  %s0 = inlined_call_operand.<no memory space> [shape: s32[1], index: 0, kind: input, shape index: {}]
  %s1 = inlined_call_operand.hbm [shape: f32[16,128], index: 1, kind: input, shape index: {}]
  %s2 = inlined_call_operand.hbm [shape: f32[16,128], index: 2, kind: input, shape index: {}]
  %s3 = inlined_call_operand.hbm [shape: f32[16,128], index: 3, kind: output, shape index: {0}]
  %s4 = inlined_call_operand.hbm [shape: f32[16,128], index: 4, kind: output, shape index: {1}]
  %5 = xla_tuple %s3, %s4
  %s6 = sld [smem:[#allocation0]]
  $region34: #{tpu_custom_call.1} parent=0
    _
  %s8 = ssub.s32 1, %s6
  %s9 = scalar_select 0, %s8, %s6
  %10 = sst [smem:[#allocation3]] %s0
  $region1: #{tpu_custom_call.1} parent=0
    #allocation4 [shape = 'u8[8192]{0}', space=vmem, size = 0x2000, scoped, tag = 'input window, operand 1, single buffered']
    #allocation5 [shape = 's32[1]{0}', space=sflag, size = 0x4, scoped, tag = 'scoped memory for tpu_custom_call.1']
    #allocation6 [shape = 's32[1]{0}', space=sflag, size = 0x4, scoped, tag = 'scoped memory for tpu_custom_call.1']
    #allocation7 [shape = 'u8[8192]{0}', space=vmem, size = 0x2000, scoped, tag = 'input window, operand 2, single buffered']
    #allocation8 [shape = 's32[1]{0}', space=sflag, size = 0x4, scoped, tag = 'scoped memory for tpu_custom_call.1']
    #allocation9 [shape = 'u8[8192]{0}', space=vmem, size = 0x2000, scoped, tag = 'output window, operand 0, single buffered']
    #allocation10 [shape = 'u8[8192]{0}', space=vmem, size = 0x2000, scoped, tag = 'output window, operand 1, single buffered']
    #allocation11 [shape = 's32[1]{0}', space=sflag, size = 0x4, scoped, tag = 'scoped memory for tpu_custom_call.1']
    %11 = vsyncpa [#allocation5], 0
    %12 = vsyncpa [#allocation8], 0
    %13 = vsyncpa [#allocation6], 0
    %14 = vsyncpa [#allocation11], 0
    // Predicated region
    $region2: #{tpu_custom_call.1} parent=1 // pred_check
      _
    $region3: #{tpu_custom_call.1} parent=1 // pred_check_branch
      %16 = sbr.rel (0) target = $region5
    $region4: #{tpu_custom_call.1} parent=1 // pred_region
      %18 = vsyncadd [#allocation5], 0
      %s19 = sshll.u32 %s1, 4
      %s20 = int_to_ptr.hbm [resolvable:$true] %s19
      %s21 = sshll.u32 [#allocation4], 4
      %s22 = int_to_ptr.vmem [resolvable:$true] %s21
      %27 = dma.hbm_to_vmem [thread:$0]  %s20, 256, %s22, [#allocation5], 128, 128, 8
    $region5: #{tpu_custom_call.1} parent=1 // pred_fallthru
      _
    // Predicated region
    $region6: #{tpu_custom_call.1} parent=1 // pred_check
      _
    $region7: #{tpu_custom_call.1} parent=1 // pred_check_branch
      %29 = sbr.rel (0) target = $region9
    $region8: #{tpu_custom_call.1} parent=1 // pred_region
      %31 = vsyncadd [#allocation8], 0
      %s32 = sshll.u32 %s2, 4
      %s33 = int_to_ptr.hbm [resolvable:$true] %s32
      %s34 = sshll.u32 [#allocation7], 4
      %s35 = int_to_ptr.vmem [resolvable:$true] %s34
      %40 = dma.hbm_to_vmem [thread:$0]  %s33, 256, %s35, [#allocation8], 128, 128, 8
    $region9: #{tpu_custom_call.1} parent=1 // pred_fallthru
      _
    // Predicated region
    $region10: #{tpu_custom_call.1} parent=1 // pred_check
      _
    $region11: #{tpu_custom_call.1} parent=1 // pred_check_branch
      %42 = sbr.rel (0) target = $region13
    $region12: #{tpu_custom_call.1} parent=1 // pred_region
      %44 = dma.done [#allocation5], 256
    $region13: #{tpu_custom_call.1} parent=1 // pred_fallthru
      _
    // Predicated region
    $region14: #{tpu_custom_call.1} parent=1 // pred_check
      _
    $region15: #{tpu_custom_call.1} parent=1 // pred_check_branch
      %46 = sbr.rel (0) target = $region17
    $region16: #{tpu_custom_call.1} parent=1 // pred_region
      %48 = dma.done [#allocation8], 256
    $region17: #{tpu_custom_call.1} parent=1 // pred_fallthru
      _
    %v49 = vlaneseq
    %v50 = vshrl.u32 %v49, 7
    %v51 = vadd.s32 %v50, 8
    %v52 = vlaneseq
    %v53 = vand.u32 %v52, 127
    %s54 = smul.u32 0, 2048
    %v55 = vmul.u32 %v50, 128
    %v56 = vmul.u32 %v51, 128
    %v57 = vstv %s54
    %v58 = vadd.s32 %v57, %v55
    %v59 = vadd.s32 %v57, %v56
    %v60 = vadd.s32 %v58, %v53
    %v61 = vadd.s32 %v59, %v53
    %s62 = sld [smem:[#allocation3]]
    %s63 = sxor.u32 %s62, 608135816
    %s64 = sshrl.u32 %s63, 16
    %s65 = sxor.u32 %s63, %s64
    %s66 = smul.u32 %s65, 2146121005
    %s67 = sshrl.u32 %s66, 15
    %s68 = sxor.u32 %s66, %s67
    %s69 = smul.u32 %s68, 2221713035
    %s70 = sshrl.u32 %s69, 16
    %s71 = sxor.u32 %s69, %s70
    %s72 = sxor.u32 %s62, 2242054355
    %s73 = sshrl.u32 %s72, 16
    %s74 = sxor.u32 %s72, %s73
    %s75 = smul.u32 %s74, 2146121005
    %s76 = sshrl.u32 %s75, 15
    %s77 = sxor.u32 %s75, %s76
    %s78 = smul.u32 %s77, 2221713035
    %s79 = sshrl.u32 %s78, 16
    %s80 = sxor.u32 %s78, %s79
    %v81 = vstv %s71
    %v82 = vxor.u32 %v60, %v81
    %v83 = vxor.u32 %v61, %v81
    %v84 = vshrl.u32 %v82, 16
    %v85 = vshrl.u32 %v83, 16
    %v86 = vxor.u32 %v82, %v84
    %v87 = vxor.u32 %v83, %v85
    %v88 = vmul.u32 %v86, 2146121005
    %v89 = vmul.u32 %v87, 2146121005
    %v90 = vshrl.u32 %v88, 15
    %v91 = vshrl.u32 %v89, 15
    %v92 = vxor.u32 %v88, %v90
    %v93 = vxor.u32 %v89, %v91
    %v94 = vmul.u32 %v92, 2221713035
    %v95 = vmul.u32 %v93, 2221713035
    %v96 = vshrl.u32 %v94, 16
    %v97 = vshrl.u32 %v95, 16
    %v98 = vxor.u32 %v94, %v96
    %v99 = vxor.u32 %v95, %v97
    %v100 = vshrl.u32 %v98, 8
    %v101 = vshrl.u32 %v99, 8
    %v102 = vcvt.s32.f32 %v100
    %v103 = vcvt.s32.f32 %v101
    %v104 = vmul.f32 %v102, 5.9604645e-08
    %v105 = vmul.f32 %v103, 5.9604645e-08
    %v106 = vstv %s80
    %v107 = vxor.u32 %v60, %v106
    %v108 = vxor.u32 %v61, %v106
    %v109 = vshrl.u32 %v107, 16
    %v110 = vshrl.u32 %v108, 16
    %v111 = vxor.u32 %v107, %v109
    %v112 = vxor.u32 %v108, %v110
    %v113 = vmul.u32 %v111, 2146121005
    %v114 = vmul.u32 %v112, 2146121005
    %v115 = vshrl.u32 %v113, 15
    %v116 = vshrl.u32 %v114, 15
    %v117 = vxor.u32 %v113, %v115
    %v118 = vxor.u32 %v114, %v116
    %v119 = vmul.u32 %v117, 2221713035
    %v120 = vmul.u32 %v118, 2221713035
    %v121 = vshrl.u32 %v119, 16
    %v122 = vshrl.u32 %v120, 16
    %v123 = vxor.u32 %v119, %v121
    %v124 = vxor.u32 %v120, %v122
    %v125 = vshrl.u32 %v123, 8
    %v126 = vshrl.u32 %v124, 8
    %v127 = vcvt.s32.f32 %v125
    %v128 = vcvt.s32.f32 %v126
    %v129 = vmul.f32 %v127, 5.9604645e-08
    %v130 = vmul.f32 %v128, 5.9604645e-08
    %v131 = vld [vmem:[#allocation4] sm:$0xff]
    %v132 = vld [vmem:[#allocation4 + $0x8] sm:$0xff]
    %v133 = vld [vmem:[#allocation7] sm:$0xff]
    %v134 = vld [vmem:[#allocation7 + $0x8] sm:$0xff]
    %v135 = vsub.f32 %v133, 1.0
    %v136 = vsub.f32 %v134, 1.0
    %v137 = vmul.f32 %v135, 2.3570225
    %v138 = vmul.f32 %v136, 2.3570225
    %v139 = vand.u32 2147483647, %v137
    %v140 = vand.u32 2147483647, %v138
    %v141 = vmul.f32 %v139, 0.3275911
    %v142 = vmul.f32 %v140, 0.3275911
    %v143 = vadd.f32 %v141, 1.0
    %v144 = vadd.f32 %v142, 1.0
    %v145 = vrcp.pop %v143
    %v146 = vrcp.pop %v144
    %v147 = vmul.f32 %v145, 1.0614054
    %v148 = vmul.f32 %v146, 1.0614054
    %v149 = vadd.f32 %v147, -1.4531521
    %v150 = vadd.f32 %v148, -1.4531521
    %v151 = vmul.f32 %v149, %v145
    %v152 = vmul.f32 %v150, %v146
    %v153 = vadd.f32 %v151, 1.4214138
    %v154 = vadd.f32 %v152, 1.4214138
    %v155 = vmul.f32 %v153, %v145
    %v156 = vmul.f32 %v154, %v146
    %v157 = vadd.f32 %v155, -0.28449672
    %v158 = vadd.f32 %v156, -0.28449672
    %v159 = vmul.f32 %v157, %v145
    %v160 = vmul.f32 %v158, %v146
    %v161 = vadd.f32 %v159, 0.2548296
    %v162 = vadd.f32 %v160, 0.2548296
    %v163 = vmul.f32 %v161, %v145
    %v164 = vmul.f32 %v162, %v146
    %v165 = vsub.f32 0.0, %v139
    %v166 = vsub.f32 0.0, %v140
    %v167 = vmul.f32 %v165, %v139
    %v168 = vmul.f32 %v166, %v140
    %v169 = vmul.f32 %v167, 1.442695
    %v170 = vpow.pop %v169
    %v171 = vmul.f32 %v168, 1.442695
    %v172 = vpow.pop %v171
    %v173 = vmul.f32 %v163, %v170
    %v174 = vmul.f32 %v164, %v172
    %v175 = vsub.f32 1.0, %v173
    %v176 = vsub.f32 1.0, %v174
    %vm177 = vcmp.ge.f32.partialorder %v137, 0.0
    %vm178 = vcmp.ge.f32.partialorder %v138, 0.0
    %v179 = vsub.f32 0.0, %v175
    %v180 = vsub.f32 0.0, %v176
    %v181 = vsel %vm177, %v175, %v179
    %v182 = vsel %vm178, %v176, %v180
    %v183 = vadd.f32 %v181, 1.0
    %v184 = vadd.f32 %v182, 1.0
    %v185 = vmul.f32 %v183, 0.5
    %v186 = vmul.f32 %v184, 0.5
    %vm187 = vcmp.lt.f32.partialorder %v104, %v185
    %vm188 = vcmp.lt.f32.partialorder %v105, %v186
    %v189 = vsel %vm187, 1, 0
    %v190 = vsel %vm188, 1, 0
    %v191 = vcvt.s32.f32 %v189
    %v192 = vcvt.s32.f32 %v190
    %v193 = vmul.f32 %v133, 0.9
    %v194 = vmul.f32 %v134, 0.9
    %v195 = vadd.f32 %v193, %v131
    %v196 = vadd.f32 %v194, %v132
    %v197 = vsub.f32 %v195, %v191
    %v198 = vsub.f32 %v196, %v192
    %v199 = vsub.f32 %v197, 1.0
    %v200 = vsub.f32 %v198, 1.0
    %v201 = vmul.f32 %v199, 2.3570225
    %v202 = vmul.f32 %v200, 2.3570225
    %v203 = vand.u32 2147483647, %v201
    %v204 = vand.u32 2147483647, %v202
    %v205 = vmul.f32 %v203, 0.3275911
    %v206 = vmul.f32 %v204, 0.3275911
    %v207 = vadd.f32 %v205, 1.0
    %v208 = vadd.f32 %v206, 1.0
    %v209 = vrcp.pop %v207
    %v210 = vrcp.pop %v208
    %v211 = vmul.f32 %v209, 1.0614054
    %v212 = vmul.f32 %v210, 1.0614054
    %v213 = vadd.f32 %v211, -1.4531521
    %v214 = vadd.f32 %v212, -1.4531521
    %v215 = vmul.f32 %v213, %v209
    %v216 = vmul.f32 %v214, %v210
    %v217 = vadd.f32 %v215, 1.4214138
    %v218 = vadd.f32 %v216, 1.4214138
    %v219 = vmul.f32 %v217, %v209
    %v220 = vmul.f32 %v218, %v210
    %v221 = vadd.f32 %v219, -0.28449672
    %v222 = vadd.f32 %v220, -0.28449672
    %v223 = vmul.f32 %v221, %v209
    %v224 = vmul.f32 %v222, %v210
    %v225 = vadd.f32 %v223, 0.2548296
    %v226 = vadd.f32 %v224, 0.2548296
    %v227 = vmul.f32 %v225, %v209
    %v228 = vmul.f32 %v226, %v210
    %v229 = vsub.f32 0.0, %v203
    %v230 = vsub.f32 0.0, %v204
    %v231 = vmul.f32 %v229, %v203
    %v232 = vmul.f32 %v230, %v204
    %v233 = vmul.f32 %v231, 1.442695
    %v234 = vpow.pop %v233
    %v235 = vmul.f32 %v232, 1.442695
    %v236 = vpow.pop %v235
    %v237 = vmul.f32 %v227, %v234
    %v238 = vmul.f32 %v228, %v236
    %v239 = vsub.f32 1.0, %v237
    %v240 = vsub.f32 1.0, %v238
    %vm241 = vcmp.ge.f32.partialorder %v201, 0.0
    %vm242 = vcmp.ge.f32.partialorder %v202, 0.0
    %v243 = vsub.f32 0.0, %v239
    %v244 = vsub.f32 0.0, %v240
    %v245 = vsel %vm241, %v239, %v243
    %v246 = vsel %vm242, %v240, %v244
    %v247 = vadd.f32 %v245, 1.0
    %v248 = vadd.f32 %v246, 1.0
    %v249 = vmul.f32 %v247, 0.5
    %v250 = vmul.f32 %v248, 0.5
    %vm251 = vcmp.lt.f32.partialorder %v129, %v249
    %vm252 = vcmp.lt.f32.partialorder %v130, %v250
    %v253 = vsel %vm251, 1, 0
    %v254 = vsel %vm252, 1, 0
    %v255 = vcvt.s32.f32 %v253
    %v256 = vcvt.s32.f32 %v254
    %257 = vst [vmem:[#allocation9] sm:$0xff] %v255
    %258 = vst [vmem:[#allocation9 + $0x8] sm:$0xff] %v256
    %259 = vst [vmem:[#allocation10] sm:$0xff] %v197
    %260 = vst [vmem:[#allocation10 + $0x8] sm:$0xff] %v198
    // Predicated region
    $region18: #{tpu_custom_call.1} parent=1 // pred_check
      _
    $region19: #{tpu_custom_call.1} parent=1 // pred_check_branch
      %262 = sbr.rel (0) target = $region21
    $region20: #{tpu_custom_call.1} parent=1 // pred_region
      %264 = vsyncadd [#allocation6], 0
      %s265 = sshll.u32 [#allocation9], 4
      %s266 = int_to_ptr.vmem [resolvable:$true] %s265
      %s267 = sshll.u32 %s3, 4
      %s268 = int_to_ptr.hbm [resolvable:$true] %s267
      %273 = dma.vmem_to_hbm [thread:$0]  %s266, 256, %s268, [#allocation6], 128, 128, 8
    $region21: #{tpu_custom_call.1} parent=1 // pred_fallthru
      _
    // Predicated region
    $region22: #{tpu_custom_call.1} parent=1 // pred_check
      _
    $region23: #{tpu_custom_call.1} parent=1 // pred_check_branch
      %275 = sbr.rel (0) target = $region25
    $region24: #{tpu_custom_call.1} parent=1 // pred_region
      %277 = vsyncadd [#allocation11], 0
      %s278 = sshll.u32 [#allocation10], 4
      %s279 = int_to_ptr.vmem [resolvable:$true] %s278
      %s280 = sshll.u32 %s4, 4
      %s281 = int_to_ptr.hbm [resolvable:$true] %s280
      %286 = dma.vmem_to_hbm [thread:$0]  %s279, 256, %s281, [#allocation11], 128, 128, 8
    $region25: #{tpu_custom_call.1} parent=1 // pred_fallthru
      _
    // Predicated region
    $region26: #{tpu_custom_call.1} parent=1 // pred_check
      _
    $region27: #{tpu_custom_call.1} parent=1 // pred_check_branch
      %288 = sbr.rel (0) target = $region29
    $region28: #{tpu_custom_call.1} parent=1 // pred_region
      %290 = dma.done [#allocation6], 256
    $region29: #{tpu_custom_call.1} parent=1 // pred_fallthru
      _
    // Predicated region
    $region30: #{tpu_custom_call.1} parent=1 // pred_check
      _
    $region31: #{tpu_custom_call.1} parent=1 // pred_check_branch
      %292 = sbr.rel (0) target = $region33
    $region32: #{tpu_custom_call.1} parent=1 // pred_region
      %294 = dma.done [#allocation11], 256
    $region33: #{tpu_custom_call.1} parent=1 // pred_fallthru
      _
    %295 = vsyncpa [#allocation5], 1
    %296 = vsyncpa [#allocation8], 1
    %297 = vsyncpa [#allocation6], 1
    %298 = vsyncpa [#allocation11], 1

</llo_original>
